<compile_context>
chip_gen: v5e
topology: v5e:2x2
jax: 0.10.0
libtpu: 0.0.40
codegen_flags: <defaults>
</compile_context>

<pallas_src>
import functools

import jax
import jax.numpy as jnp
from jax.experimental import pallas as pl
from jax.experimental.pallas import tpu as pltpu


# ----------------------------------------------------------------------------
# Pallas kernel: stacked-real complex channel mixing for one (corner, K-tile)
#   out[k, b, :] = x2[k, b, :] @ w4[k, :, :]      (contraction over 2*Cin, on MXU)
# ----------------------------------------------------------------------------
def _spectral_mix_kernel(x_ref, w_ref, o_ref):
    # x_ref: (1, tk, B,   Ci2)   f32
    # w_ref: (1, tk, Ci2, Co2)   f32
    # o_ref: (1, tk, B,   Co2)   f32
    o_ref[0] = jnp.einsum(
        "kbi,kio->kbo",
        x_ref[0],
        w_ref[0],
        preferred_element_type=jnp.float32,
    )


def _largest_divisor_leq(n, cap):
    for d in range(min(n, cap), 0, -1):
        if n % d == 0:
            return d
    return 1


def _spectral_mix(x2, w4):
    """x2: (NC, K, B, Ci2)   w4: (NC, K, Ci2, Co2)   ->   (NC, K, B, Co2)  f32."""
    NC, K, B, Ci2 = x2.shape
    Co2 = w4.shape[-1]

    # K-tile size: a divisor of K, giving the pipeline / megacore several steps
    # while keeping per-step VMEM small.
    tk = _largest_divisor_leq(K, max(8, K // 4))

    x_spec = pl.BlockSpec((1, tk, B, Ci2), lambda c, kt: (c, kt, 0, 0))
    w_spec = pl.BlockSpec((1, tk, Ci2, Co2), lambda c, kt: (c, kt, 0, 0))
    o_spec = pl.BlockSpec((1, tk, B, Co2), lambda c, kt: (c, kt, 0, 0))

    return pl.pallas_call(
        _spectral_mix_kernel,
        grid=(NC, K // tk),
        in_specs=[x_spec, w_spec],
        out_specs=o_spec,
        out_shape=jax.ShapeDtypeStruct((NC, K, B, Co2), jnp.float32),
        compiler_params=pltpu.CompilerParams(
            dimension_semantics=("parallel", "parallel"),
            vmem_limit_bytes=32 * 1024 * 1024,
        ),
    )(x2, w4)


def _round_up(n, m):
    return ((n + m - 1) // m) * m


# ----------------------------------------------------------------------------
# Full SpectralConvolution forward (2-D modes case: len(modes) == 2)
# ----------------------------------------------------------------------------
# TODO(synk): only the dim==2 case of the PyTorch module is implemented; the
#             general dim>2 mix_matrix corner enumeration is not covered here.
@functools.partial(jax.jit, static_argnames=("modes",))
def spectral_convolution(x, w_real, w_imag, modes):
    """
    x:       (B, Cin, H, W)  float32          (NCHW, same as PyTorch)
    w_real:  (2, Cin, Cout, m1, m2) float32   (real part of the 2 corner weights)
    w_imag:  (2, Cin, Cout, m1, m2) float32
    modes:   (m1, m2)
    returns: (B, Cout, H, W) float32
    """
    m1, m2 = modes
    B, Cin, H, W = x.shape
    Cout = w_real.shape[2]
    K = m1 * m2
    Wr = W // 2 + 1
    assert m2 <= Wr, "modes[-1] must fit in the rfft half-spectrum (W//2+1)"
    assert m1 <= H

    # Forward FFT: rfftn (x is real); retained columns :m2 are inside the
    # half-spectrum so they equal the corresponding fftn values.
    x_ft = jnp.fft.rfftn(x.astype(jnp.float32), axes=(-2, -1))  # (B,Cin,H,Wr) c64

    # The two retained corners (dim==2 -> 2^(dim-1) == 2 weights):
    #   corner 0: [:m1, :m2]     corner 1: [H-m1:, :m2]
    x_low = x_ft[:, :, :m1, :m2]
    x_high = x_ft[:, :, H - m1:, :m2]
    x_c = jnp.stack([x_low, x_high], axis=0)                     # (2,B,Cin,m1,m2)
    xr = jnp.real(x_c).reshape(2, B, Cin, K).astype(jnp.float32)
    xi = jnp.imag(x_c).reshape(2, B, Cin, K).astype(jnp.float32)

    # Padded kernel dims: sublane-granular contraction, lane-dense output.
    Ci2 = _round_up(2 * Cin, 8)
    Co2 = _round_up(2 * Cout, 128)

    # Stacked input: rows [Re ; Im] along the contraction axis.
    x2 = jnp.concatenate([xr, xi], axis=2)                       # (2, B, 2Cin, K)
    x2 = jnp.transpose(x2, (0, 3, 1, 2))                         # (2, K, B, 2Cin)
    x2 = jnp.pad(x2, ((0, 0), (0, 0), (0, 0), (0, Ci2 - 2 * Cin)))

    # Stacked weights: W4 = [[wr, wi], [-wi, wr]]
    #   rows  (contraction): [Re-part ; Im-part]
    #   cols  (output):      [Re out  ; Im out]
    wr = w_real.reshape(2, Cin, Cout, K).astype(jnp.float32)
    wi = w_imag.reshape(2, Cin, Cout, K).astype(jnp.float32)
    w_top = jnp.concatenate([wr, wi], axis=2)                    # (2, Cin, 2Cout, K)
    w_bot = jnp.concatenate([-wi, wr], axis=2)                   # (2, Cin, 2Cout, K)
    w4 = jnp.concatenate([w_top, w_bot], axis=1)                 # (2, 2Cin, 2Cout, K)
    w4 = jnp.transpose(w4, (0, 3, 1, 2))                         # (2, K, 2Cin, 2Cout)
    w4 = jnp.pad(w4, ((0, 0), (0, 0), (0, Ci2 - 2 * Cin), (0, Co2 - 2 * Cout)))

    out = _spectral_mix(x2, w4)                                  # (2, K, B, Co2)

    out_r = out[..., :Cout]                                      # (2, K, B, Cout)
    out_i = out[..., Cout:2 * Cout]
    out_c = (out_r + 1j * out_i).astype(jnp.complex64)
    out_c = jnp.transpose(out_c, (0, 2, 3, 1)).reshape(2, B, Cout, m1, m2)

    # Scatter the corners into the rfft-truncated output spectrum and invert.
    out_ft = jnp.zeros((B, Cout, H, Wr), dtype=jnp.complex64)
    out_ft = out_ft.at[:, :, :m1, :m2].set(out_c[0])
    out_ft = out_ft.at[:, :, H - m1:, :m2].set(out_c[1])

    out = jnp.fft.irfftn(out_ft, s=(H, W), axes=(-2, -1))        # (B,Cout,H,W) f32
    return out.astype(jnp.float32)


# ----------------------------------------------------------------------------
# Pure-JAX reference (mirrors the PyTorch forward) for a correctness check.
# ----------------------------------------------------------------------------
def reference(x, w_real, w_imag, modes):
    m1, m2 = modes
    B, Cin, H, W = x.shape
    Cout = w_real.shape[2]
    w = (w_real + 1j * w_imag).astype(jnp.complex64)
    x_ft = jnp.fft.fftn(x, axes=(-2, -1))
    out_ft = jnp.zeros((B, Cout, H, W // 2 + 1), dtype=jnp.complex64)
    out_ft = out_ft.at[:, :, :m1, :m2].set(
        jnp.einsum('bixy,ioxy->boxy', x_ft[:, :, :m1, :m2], w[0]))
    out_ft = out_ft.at[:, :, H - m1:, :m2].set(
        jnp.einsum('bixy,ioxy->boxy', x_ft[:, :, -m1:, :m2], w[1]))
    return jnp.fft.irfftn(out_ft, s=(H, W), axes=(-2, -1)).astype(jnp.float32)


if __name__ == "__main__":
    # Small, deterministic setup consistent with the module:
    #   in_channels=4, out_channels=4, modes=[4, 4], input (2, 4, 16, 16)
    B, Cin, Cout, H, W = 2, 4, 4, 16, 16
    modes = (4, 4)
    m1, m2 = modes

    key = jax.random.PRNGKey(0)
    kx, kwr, kwi = jax.random.split(key, 3)

    x = jax.random.normal(kx, (B, Cin, H, W), dtype=jnp.float32)

    # Deterministic parameter init (2^(dim-1)=2 complex weight tensors of shape
    # (Cin, Cout, m1, m2), scaled by 1/(Cin*Cout) like the module's __init__).
    scale = 1.0 / (Cin * Cout)
    w_real = scale * jax.random.normal(kwr, (2, Cin, Cout, m1, m2), dtype=jnp.float32)
    w_imag = scale * jax.random.normal(kwi, (2, Cin, Cout, m1, m2), dtype=jnp.float32)

    out = spectral_convolution(x, w_real, w_imag, modes)
    out = jax.block_until_ready(out)

    ref = jax.block_until_ready(reference(x, w_real, w_imag, modes))
    assert out.shape == (B, Cout, H, W), out.shape
    assert out.dtype == jnp.float32, out.dtype
    assert jnp.allclose(out, ref, atol=1e-4, rtol=1e-4), "mismatch vs reference"

    print("KERNEL_OK")
</pallas_src>

<mosaic_0001>
module attributes {stable_mosaic.version = 11 : i64} {
  func.func @_spectral_mix_kernel(%arg0: i32, %arg1: i32, %arg2: memref<1x8x2x8xf32, #tpu.memory_space<vmem>>, %arg3: memref<1x8x8x128xf32, #tpu.memory_space<vmem>>, %arg4: memref<1x8x2x128xf32, #tpu.memory_space<vmem>>) attributes {dimension_semantics = [#tpu.dimension_semantics<parallel>, #tpu.dimension_semantics<parallel>], iteration_bounds = array<i64: 2, 2>, scalar_prefetch = 0 : i64, scratch_operands = 0 : i64, tpu.core_type = #tpu.core_type<tc>, window_params = [{transform_indices = @transform_0, window_bounds = array<i64: 1, 8, 2, 8>}, {transform_indices = @transform_1, window_bounds = array<i64: 1, 8, 8, 128>}, {transform_indices = @transform_2, window_bounds = array<i64: 1, 8, 2, 128>}]} {
    %c0 = arith.constant 0 : index
    %c0_0 = arith.constant 0 : index
    %c0_1 = arith.constant 0 : index
    %c0_2 = arith.constant 0 : index
    %0 = vector.load %arg2[%c0, %c0_0, %c0_1, %c0_2] : memref<1x8x2x8xf32, #tpu.memory_space<vmem>>, vector<1x8x2x8xf32>
    %1 = vector.shape_cast %0 : vector<1x8x2x8xf32> to vector<8x2x8xf32>
    %c0_3 = arith.constant 0 : index
    %c0_4 = arith.constant 0 : index
    %c0_5 = arith.constant 0 : index
    %c0_6 = arith.constant 0 : index
    %2 = vector.load %arg3[%c0_3, %c0_4, %c0_5, %c0_6] : memref<1x8x8x128xf32, #tpu.memory_space<vmem>>, vector<1x8x8x128xf32>
    %3 = vector.shape_cast %2 : vector<1x8x8x128xf32> to vector<8x8x128xf32>
    "tpu.trace_start"() <{level = 10 : i32, message = "kbi,kio->kbo"}> : () -> ()
    %cst = arith.constant dense<0.000000e+00> : vector<8x2x128xf32>
    %4 = tpu.matmul %1, %3, %cst {dimension_numbers = #tpu.dot_dimension_numbers<[2], [1], [1], [2], [0, 0, 0, 1, 1, 2], [0], [0]>} : vector<8x2x8xf32>, vector<8x8x128xf32>, vector<8x2x128xf32> -> vector<8x2x128xf32>
    "tpu.trace_stop"() : () -> ()
    %c0_7 = arith.constant 0 : index
    %c0_8 = arith.constant 0 : index
    %c0_9 = arith.constant 0 : index
    %c0_10 = arith.constant 0 : index
    %5 = vector.load %arg4[%c0_7, %c0_8, %c0_9, %c0_10] : memref<1x8x2x128xf32, #tpu.memory_space<vmem>>, vector<1x8x2x128xf32>
    %6 = vector.shape_cast %5 : vector<1x8x2x128xf32> to vector<8x2x128xf32>
    %7 = vector.shape_cast %4 : vector<8x2x128xf32> to vector<1x8x2x128xf32>
    tpu.vector_store %arg4[%c0_7, %c0_8, %c0_9, %c0_10], %7 {strides = array<i32>} : memref<1x8x2x128xf32, #tpu.memory_space<vmem>>, vector<1x8x2x128xf32>,
    return
  }
  func.func @transform_0(%arg0: i32, %arg1: i32) -> (i32, i32, i32, i32) {
    %c0_i32 = arith.constant 0 : i32
    %c0_i32_0 = arith.constant 0 : i32
    %c0_i32_1 = arith.constant 0 : i32
    return %arg0, %arg1, %c0_i32, %c0_i32_0 : i32, i32, i32, i32
  }
  func.func @transform_1(%arg0: i32, %arg1: i32) -> (i32, i32, i32, i32) {
    %c0_i32 = arith.constant 0 : i32
    %c0_i32_0 = arith.constant 0 : i32
    %c0_i32_1 = arith.constant 0 : i32
    return %arg0, %arg1, %c0_i32, %c0_i32_0 : i32, i32, i32, i32
  }
  func.func @transform_2(%arg0: i32, %arg1: i32) -> (i32, i32, i32, i32) {
    %c0_i32 = arith.constant 0 : i32
    %c0_i32_0 = arith.constant 0 : i32
    %c0_i32_1 = arith.constant 0 : i32
    return %arg0, %arg1, %c0_i32, %c0_i32_0 : i32, i32, i32, i32
  }
}

</mosaic_0001>

<llo_original>
// kernel: neg.1
$region0: #{neg.1}
  #allocation0 [shape = 's32[1]{0}', space=sflag, size = 0x4, scoped, tag = 'scoped memory for neg.1']
  %s0 = inlined_call_operand.vmem [shape: f32[2,4,4,16], index: 0, kind: input, shape index: {}]
  %s1 = inlined_call_operand.vmem [shape: f32[2,4,4,16], index: 1, kind: output, shape index: {}]
  %v2 = vld [vmem:[%s0] sm:$0xf]
  %3 = xla_tuple %v2
  %4 = xla_tuple %3
  %v5 = vxor.u32 %v2, 2147483648
  %6 = xla_tuple %v5
  %7 = vst [vmem:[%s1] sm:$0xf] %v5
  %s8 = scalar_lea.vmem %s0, 64
  %v9 = vld [vmem:[%s8] sm:$0xf]
  %10 = xla_tuple %v9
  %11 = xla_tuple %10
  %v12 = vxor.u32 %v9, 2147483648
  %13 = xla_tuple %v12
  %s14 = scalar_lea.vmem %s1, 64
  %15 = vst [vmem:[%s14] sm:$0xf] %v12
  %s16 = scalar_lea.vmem %s0, 4
  %v17 = vld [vmem:[%s16] sm:$0xf]
  %18 = xla_tuple %v17
  %19 = xla_tuple %18
  %v20 = vxor.u32 %v17, 2147483648
  %21 = xla_tuple %v20
  %s22 = scalar_lea.vmem %s1, 4
  %23 = vst [vmem:[%s22] sm:$0xf] %v20
  %s24 = scalar_lea.vmem %s0, 68
  %v25 = vld [vmem:[%s24] sm:$0xf]
  %26 = xla_tuple %v25
  %27 = xla_tuple %26
  %v28 = vxor.u32 %v25, 2147483648
  %29 = xla_tuple %v28
  %s30 = scalar_lea.vmem %s1, 68
  %31 = vst [vmem:[%s30] sm:$0xf] %v28
  %s32 = scalar_lea.vmem %s0, 8
  %v33 = vld [vmem:[%s32] sm:$0xf]
  %34 = xla_tuple %v33
  %35 = xla_tuple %34
  %v36 = vxor.u32 %v33, 2147483648
  %37 = xla_tuple %v36
  %s38 = scalar_lea.vmem %s1, 8
  %39 = vst [vmem:[%s38] sm:$0xf] %v36
  %s40 = scalar_lea.vmem %s0, 72
  %v41 = vld [vmem:[%s40] sm:$0xf]
  %42 = xla_tuple %v41
  %43 = xla_tuple %42
  %v44 = vxor.u32 %v41, 2147483648
  %45 = xla_tuple %v44
  %s46 = scalar_lea.vmem %s1, 72
  %47 = vst [vmem:[%s46] sm:$0xf] %v44
  %s48 = scalar_lea.vmem %s0, 12
  %v49 = vld [vmem:[%s48] sm:$0xf]
  %50 = xla_tuple %v49
  %51 = xla_tuple %50
  %v52 = vxor.u32 %v49, 2147483648
  %53 = xla_tuple %v52
  %s54 = scalar_lea.vmem %s1, 12
  %55 = vst [vmem:[%s54] sm:$0xf] %v52
  %s56 = scalar_lea.vmem %s0, 76
  %v57 = vld [vmem:[%s56] sm:$0xf]
  %58 = xla_tuple %v57
  %59 = xla_tuple %58
  %v60 = vxor.u32 %v57, 2147483648
  %61 = xla_tuple %v60
  %s62 = scalar_lea.vmem %s1, 76
  %63 = vst [vmem:[%s62] sm:$0xf] %v60
  %s64 = scalar_lea.vmem %s0, 16
  %v65 = vld [vmem:[%s64] sm:$0xf]
  %66 = xla_tuple %v65
  %67 = xla_tuple %66
  %v68 = vxor.u32 %v65, 2147483648
  %69 = xla_tuple %v68
  %s70 = scalar_lea.vmem %s1, 16
  %71 = vst [vmem:[%s70] sm:$0xf] %v68
  %s72 = scalar_lea.vmem %s0, 80
  %v73 = vld [vmem:[%s72] sm:$0xf]
  %74 = xla_tuple %v73
  %75 = xla_tuple %74
  %v76 = vxor.u32 %v73, 2147483648
  %77 = xla_tuple %v76
  %s78 = scalar_lea.vmem %s1, 80
  %79 = vst [vmem:[%s78] sm:$0xf] %v76
  %s80 = scalar_lea.vmem %s0, 20
  %v81 = vld [vmem:[%s80] sm:$0xf]
  %82 = xla_tuple %v81
  %83 = xla_tuple %82
  %v84 = vxor.u32 %v81, 2147483648
  %85 = xla_tuple %v84
  %s86 = scalar_lea.vmem %s1, 20
  %87 = vst [vmem:[%s86] sm:$0xf] %v84
  %s88 = scalar_lea.vmem %s0, 84
  %v89 = vld [vmem:[%s88] sm:$0xf]
  %90 = xla_tuple %v89
  %91 = xla_tuple %90
  %v92 = vxor.u32 %v89, 2147483648
  %93 = xla_tuple %v92
  %s94 = scalar_lea.vmem %s1, 84
  %95 = vst [vmem:[%s94] sm:$0xf] %v92
  %s96 = scalar_lea.vmem %s0, 24
  %v97 = vld [vmem:[%s96] sm:$0xf]
  %98 = xla_tuple %v97
  %99 = xla_tuple %98
  %v100 = vxor.u32 %v97, 2147483648
  %101 = xla_tuple %v100
  %s102 = scalar_lea.vmem %s1, 24
  %103 = vst [vmem:[%s102] sm:$0xf] %v100
  %s104 = scalar_lea.vmem %s0, 88
  %v105 = vld [vmem:[%s104] sm:$0xf]
  %106 = xla_tuple %v105
  %107 = xla_tuple %106
  %v108 = vxor.u32 %v105, 2147483648
  %109 = xla_tuple %v108
  %s110 = scalar_lea.vmem %s1, 88
  %111 = vst [vmem:[%s110] sm:$0xf] %v108
  %s112 = scalar_lea.vmem %s0, 28
  %v113 = vld [vmem:[%s112] sm:$0xf]
  %114 = xla_tuple %v113
  %115 = xla_tuple %114
  %v116 = vxor.u32 %v113, 2147483648
  %117 = xla_tuple %v116
  %s118 = scalar_lea.vmem %s1, 28
  %119 = vst [vmem:[%s118] sm:$0xf] %v116
  %s120 = scalar_lea.vmem %s0, 92
  %v121 = vld [vmem:[%s120] sm:$0xf]
  %122 = xla_tuple %v121
  %123 = xla_tuple %122
  %v124 = vxor.u32 %v121, 2147483648
  %125 = xla_tuple %v124
  %s126 = scalar_lea.vmem %s1, 92
  %127 = vst [vmem:[%s126] sm:$0xf] %v124
  %s128 = scalar_lea.vmem %s0, 32
  %v129 = vld [vmem:[%s128] sm:$0xf]
  %130 = xla_tuple %v129
  %131 = xla_tuple %130
  %v132 = vxor.u32 %v129, 2147483648
  %133 = xla_tuple %v132
  %s134 = scalar_lea.vmem %s1, 32
  %135 = vst [vmem:[%s134] sm:$0xf] %v132
  %s136 = scalar_lea.vmem %s0, 96
  %v137 = vld [vmem:[%s136] sm:$0xf]
  %138 = xla_tuple %v137
  %139 = xla_tuple %138
  %v140 = vxor.u32 %v137, 2147483648
  %141 = xla_tuple %v140
  %s142 = scalar_lea.vmem %s1, 96
  %143 = vst [vmem:[%s142] sm:$0xf] %v140
  %s144 = scalar_lea.vmem %s0, 36
  %v145 = vld [vmem:[%s144] sm:$0xf]
  %146 = xla_tuple %v145
  %147 = xla_tuple %146
  %v148 = vxor.u32 %v145, 2147483648
  %149 = xla_tuple %v148
  %s150 = scalar_lea.vmem %s1, 36
  %151 = vst [vmem:[%s150] sm:$0xf] %v148
  %s152 = scalar_lea.vmem %s0, 100
  %v153 = vld [vmem:[%s152] sm:$0xf]
  %154 = xla_tuple %v153
  %155 = xla_tuple %154
  %v156 = vxor.u32 %v153, 2147483648
  %157 = xla_tuple %v156
  %s158 = scalar_lea.vmem %s1, 100
  %159 = vst [vmem:[%s158] sm:$0xf] %v156
  %s160 = scalar_lea.vmem %s0, 40
  %v161 = vld [vmem:[%s160] sm:$0xf]
  %162 = xla_tuple %v161
  %163 = xla_tuple %162
  %v164 = vxor.u32 %v161, 2147483648
  %165 = xla_tuple %v164
  %s166 = scalar_lea.vmem %s1, 40
  %167 = vst [vmem:[%s166] sm:$0xf] %v164
  %s168 = scalar_lea.vmem %s0, 104
  %v169 = vld [vmem:[%s168] sm:$0xf]
  %170 = xla_tuple %v169
  %171 = xla_tuple %170
  %v172 = vxor.u32 %v169, 2147483648
  %173 = xla_tuple %v172
  %s174 = scalar_lea.vmem %s1, 104
  %175 = vst [vmem:[%s174] sm:$0xf] %v172
  %s176 = scalar_lea.vmem %s0, 44
  %v177 = vld [vmem:[%s176] sm:$0xf]
  %178 = xla_tuple %v177
  %179 = xla_tuple %178
  %v180 = vxor.u32 %v177, 2147483648
  %181 = xla_tuple %v180
  %s182 = scalar_lea.vmem %s1, 44
  %183 = vst [vmem:[%s182] sm:$0xf] %v180
  %s184 = scalar_lea.vmem %s0, 108
  %v185 = vld [vmem:[%s184] sm:$0xf]
  %186 = xla_tuple %v185
  %187 = xla_tuple %186
  %v188 = vxor.u32 %v185, 2147483648
  %189 = xla_tuple %v188
  %s190 = scalar_lea.vmem %s1, 108
  %191 = vst [vmem:[%s190] sm:$0xf] %v188
  %s192 = scalar_lea.vmem %s0, 48
  %v193 = vld [vmem:[%s192] sm:$0xf]
  %194 = xla_tuple %v193
  %195 = xla_tuple %194
  %v196 = vxor.u32 %v193, 2147483648
  %197 = xla_tuple %v196
  %s198 = scalar_lea.vmem %s1, 48
  %199 = vst [vmem:[%s198] sm:$0xf] %v196
  %s200 = scalar_lea.vmem %s0, 112
  %v201 = vld [vmem:[%s200] sm:$0xf]
  %202 = xla_tuple %v201
  %203 = xla_tuple %202
  %v204 = vxor.u32 %v201, 2147483648
  %205 = xla_tuple %v204
  %s206 = scalar_lea.vmem %s1, 112
  %207 = vst [vmem:[%s206] sm:$0xf] %v204
  %s208 = scalar_lea.vmem %s0, 52
  %v209 = vld [vmem:[%s208] sm:$0xf]
  %210 = xla_tuple %v209
  %211 = xla_tuple %210
  %v212 = vxor.u32 %v209, 2147483648
  %213 = xla_tuple %v212
  %s214 = scalar_lea.vmem %s1, 52
  %215 = vst [vmem:[%s214] sm:$0xf] %v212
  %s216 = scalar_lea.vmem %s0, 116
  %v217 = vld [vmem:[%s216] sm:$0xf]
  %218 = xla_tuple %v217
  %219 = xla_tuple %218
  %v220 = vxor.u32 %v217, 2147483648
  %221 = xla_tuple %v220
  %s222 = scalar_lea.vmem %s1, 116
  %223 = vst [vmem:[%s222] sm:$0xf] %v220
  %s224 = scalar_lea.vmem %s0, 56
  %v225 = vld [vmem:[%s224] sm:$0xf]
  %226 = xla_tuple %v225
  %227 = xla_tuple %226
  %v228 = vxor.u32 %v225, 2147483648
  %229 = xla_tuple %v228
  %s230 = scalar_lea.vmem %s1, 56
  %231 = vst [vmem:[%s230] sm:$0xf] %v228
  %s232 = scalar_lea.vmem %s0, 120
  %v233 = vld [vmem:[%s232] sm:$0xf]
  %234 = xla_tuple %v233
  %235 = xla_tuple %234
  %v236 = vxor.u32 %v233, 2147483648
  %237 = xla_tuple %v236
  %s238 = scalar_lea.vmem %s1, 120
  %239 = vst [vmem:[%s238] sm:$0xf] %v236
  %s240 = scalar_lea.vmem %s0, 60
  %v241 = vld [vmem:[%s240] sm:$0xf]
  %242 = xla_tuple %v241
  %243 = xla_tuple %242
  %v244 = vxor.u32 %v241, 2147483648
  %245 = xla_tuple %v244
  %s246 = scalar_lea.vmem %s1, 60
  %247 = vst [vmem:[%s246] sm:$0xf] %v244
  %s248 = scalar_lea.vmem %s0, 124
  %v249 = vld [vmem:[%s248] sm:$0xf]
  %250 = xla_tuple %v249
  %251 = xla_tuple %250
  %v252 = vxor.u32 %v249, 2147483648
  %253 = xla_tuple %v252
  %s254 = scalar_lea.vmem %s1, 124
  %255 = vst [vmem:[%s254] sm:$0xf] %v252

// kernel: reverse.1
$region0: #{reverse.1}
  %s0 = inlined_call_operand.vmem [shape: f32[2,4,16,7], index: 0, kind: input, shape index: {}]
  %s1 = inlined_call_operand.vmem [shape: f32[2,4,16,7], index: 1, kind: output, shape index: {}]
  $region1: #{reverse.1} parent=0
    #allocation0 [shape = 'u8[65536]{0}', space=vmem, size = 0x10000, scoped, tag = 'operand span for operand 0']
    #allocation1 [shape = 'u8[32768]{0}', space=vmem, size = 0x8000, scoped, tag = 'operand span for operand 1']
    %s2 = scalar_lea.vmem [#allocation0], 8
    // Predicated region
    $region2: #{reverse.1} parent=1 // pred_check
      _
    $region3: #{reverse.1} parent=1 // pred_check_branch
      %4 = sbr.rel (0) target = $region5
    $region4: #{reverse.1} parent=1 // pred_region
      // Predicated region
      $region6: #{reverse.1} parent=4 // pred_check
        _
      $region7: #{reverse.1} parent=4 // pred_check_branch
        %6 = sbr.rel (0) target = $region9
      $region8: #{reverse.1} parent=4 // pred_region
        // Predicated region
        $region21: #{reverse.1} parent=8 // pred_check
          _
        $region22: #{reverse.1} parent=8 // pred_check_branch
          %36 = sbr.rel (0) target = $region24
        $region23: #{reverse.1} parent=8 // pred_region
          loop: start=0, step=1, limit=1
          $region25: #{reverse.1} parent=23 // loop_pre_header
            _
          $region26: #{reverse.1} parent=23 // loop_header
            %s38 = sphi 0, %s42
            %p39 = scmp.ge.s32.totalorder %s38, 1
            %s43 = sphi %s0, %s0
            %s44 = sphi %s2, %s2
          $region27: #{reverse.1} parent=23 // loop_header_branch
            %41 = sbr.rel (%p39) target = $region31
          $region28: #{reverse.1} parent=23 // loop_body
            %v45 = vld [vmem:[%s43] sm:$0xff]
            %46 = vst [vmem:[%s44] sm:$0xff] %v45
            %v47 = vld [vmem:[%s43 + $0x8] sm:$0xff]
            %48 = vst [vmem:[%s44 + $0x10] sm:$0xff] %v47
            %v49 = vld [vmem:[%s43 + $0x10] sm:$0xff]
            %50 = vst [vmem:[%s44 + $0x20] sm:$0xff] %v49
            %v51 = vld [vmem:[%s43 + $0x18] sm:$0xff]
            %52 = vst [vmem:[%s44 + $0x30] sm:$0xff] %v51
            %v53 = vld [vmem:[%s43 + $0x20] sm:$0xff]
            %54 = vst [vmem:[%s44 + $0x40] sm:$0xff] %v53
            %v55 = vld [vmem:[%s43 + $0x28] sm:$0xff]
            %56 = vst [vmem:[%s44 + $0x50] sm:$0xff] %v55
            %v57 = vld [vmem:[%s43 + $0x30] sm:$0xff]
            %58 = vst [vmem:[%s44 + $0x60] sm:$0xff] %v57
            %v59 = vld [vmem:[%s43 + $0x38] sm:$0xff]
            %60 = vst [vmem:[%s44 + $0x70] sm:$0xff] %v59
          $region29: #{reverse.1} parent=23 // loop_footer
            %s42 = sadd.s32 1, %s38
          $region30: #{reverse.1} parent=23 // loop_footer_branch
            %37 = sbr.rel target = $region26
          $region31: #{reverse.1} parent=23 // loop_exit
            _
        $region24: #{reverse.1} parent=8 // pred_fallthru
          _
        // Predicated region
        $region32: #{reverse.1} parent=8 // pred_check
          _
        $region33: #{reverse.1} parent=8 // pred_check_branch
          %62 = sbr.rel target = $region35
        $region34: #{reverse.1} parent=8 // pred_region
          _
        $region35: #{reverse.1} parent=8 // pred_fallthru
          _
      $region9: #{reverse.1} parent=4 // pred_fallthru
        _
      // Predicated region
      $region10: #{reverse.1} parent=4 // pred_check
        _
      $region11: #{reverse.1} parent=4 // pred_check_branch
        %8 = sbr.rel target = $region13
      $region12: #{reverse.1} parent=4 // pred_region
        %s10 = ssub.s32 256, 1
        loop: start=0, step=1, limit=1
        $region14: #{reverse.1} parent=12 // loop_pre_header
          _
        $region15: #{reverse.1} parent=12 // loop_header
          %s12 = sphi 0, %s16
          %p13 = scmp.ge.s32.totalorder %s12, 1
          %s17 = sphi %s0, %s0
          %s18 = sphi %s2, %s2
        $region16: #{reverse.1} parent=12 // loop_header_branch
          %15 = sbr.rel (%p13) target = $region20
        $region17: #{reverse.1} parent=12 // loop_body
          %v19 = vld [vmem:[%s17] sm:%s10]
          %20 = vst [vmem:[%s18] sm:%s10] %v19
          %v21 = vld [vmem:[%s17 + $0x8] sm:%s10]
          %22 = vst [vmem:[%s18 + $0x10] sm:%s10] %v21
          %v23 = vld [vmem:[%s17 + $0x10] sm:%s10]
          %24 = vst [vmem:[%s18 + $0x20] sm:%s10] %v23
          %v25 = vld [vmem:[%s17 + $0x18] sm:%s10]
          %26 = vst [vmem:[%s18 + $0x30] sm:%s10] %v25
          %v27 = vld [vmem:[%s17 + $0x20] sm:%s10]
          %28 = vst [vmem:[%s18 + $0x40] sm:%s10] %v27
          %v29 = vld [vmem:[%s17 + $0x28] sm:%s10]
          %30 = vst [vmem:[%s18 + $0x50] sm:%s10] %v29
          %v31 = vld [vmem:[%s17 + $0x30] sm:%s10]
          %32 = vst [vmem:[%s18 + $0x60] sm:%s10] %v31
          %v33 = vld [vmem:[%s17 + $0x38] sm:%s10]
          %34 = vst [vmem:[%s18 + $0x70] sm:%s10] %v33
        $region18: #{reverse.1} parent=12 // loop_footer
          %s16 = sadd.s32 1, %s12
        $region19: #{reverse.1} parent=12 // loop_footer_branch
          %11 = sbr.rel target = $region15
        $region20: #{reverse.1} parent=12 // loop_exit
          _
      $region13: #{reverse.1} parent=4 // pred_fallthru
        _
    $region5: #{reverse.1} parent=1 // pred_fallthru
      _
    %63 = vnop
    %s64 = scalar_lea.vmem [#allocation0], 7
    %v65 = vld [vmem:[%s64] ss:$-1 sm:$0xff]
    %v66 = vrot.slane %v65, 1
    %67 = vst [vmem:[#allocation1] sm:$0xff] %v66
    %s68 = scalar_lea.vmem [#allocation0], 8
    %s69 = scalar_lea.vmem %s68, 7 [#allocation0]
    %v70 = vld [vmem:[%s69] ss:$-1 sm:$0xff]
    %v71 = vrot.slane %v70, 1
    %v72 = vlaneseq
    %v73 = vshrl.u32 %v72, 7
    %vm74 = vcmp.lt.s32.totalorder %v73, 7
    %75 = vst.msk [vmem:[#allocation1] sm:$0xff] %vm74, %v71
    %s76 = scalar_lea.vmem [#allocation1], 8
    %s77 = scalar_lea.vmem [#allocation0], 16
    %s78 = scalar_lea.vmem %s77, 7 [#allocation0]
    %v79 = vld [vmem:[%s78] ss:$-1 sm:$0xff]
    %v80 = vrot.slane %v79, 1
    %81 = vst [vmem:[%s76] sm:$0xff] %v80
    %s82 = scalar_lea.vmem %s77, 8 [#allocation0]
    %s83 = scalar_lea.vmem %s82, 7 [#allocation0]
    %v84 = vld [vmem:[%s83] ss:$-1 sm:$0xff]
    %v85 = vrot.slane %v84, 1
    %v86 = vlaneseq
    %v87 = vshrl.u32 %v86, 7
    %vm88 = vcmp.lt.s32.totalorder %v87, 7
    %89 = vst.msk [vmem:[%s76] sm:$0xff] %vm88, %v85
    %s90 = scalar_lea.vmem [#allocation1], 16
    %s91 = scalar_lea.vmem [#allocation0], 32
    %s92 = scalar_lea.vmem %s91, 7 [#allocation0]
    %v93 = vld [vmem:[%s92] ss:$-1 sm:$0xff]
    %v94 = vrot.slane %v93, 1
    %95 = vst [vmem:[%s90] sm:$0xff] %v94
    %s96 = scalar_lea.vmem %s91, 8 [#allocation0]
    %s97 = scalar_lea.vmem %s96, 7 [#allocation0]
    %v98 = vld [vmem:[%s97] ss:$-1 sm:$0xff]
    %v99 = vrot.slane %v98, 1
    %v100 = vlaneseq
    %v101 = vshrl.u32 %v100, 7
    %vm102 = vcmp.lt.s32.totalorder %v101, 7
    %103 = vst.msk [vmem:[%s90] sm:$0xff] %vm102, %v99
    %s104 = scalar_lea.vmem [#allocation1], 24
    %s105 = scalar_lea.vmem [#allocation0], 48
    %s106 = scalar_lea.vmem %s105, 7 [#allocation0]
    %v107 = vld [vmem:[%s106] ss:$-1 sm:$0xff]
    %v108 = vrot.slane %v107, 1
    %109 = vst [vmem:[%s104] sm:$0xff] %v108
    %s110 = scalar_lea.vmem %s105, 8 [#allocation0]
    %s111 = scalar_lea.vmem %s110, 7 [#allocation0]
    %v112 = vld [vmem:[%s111] ss:$-1 sm:$0xff]
    %v113 = vrot.slane %v112, 1
    %v114 = vlaneseq
    %v115 = vshrl.u32 %v114, 7
    %vm116 = vcmp.lt.s32.totalorder %v115, 7
    %117 = vst.msk [vmem:[%s104] sm:$0xff] %vm116, %v113
    %s118 = scalar_lea.vmem [#allocation1], 32
    %s119 = scalar_lea.vmem [#allocation0], 64
    %s120 = scalar_lea.vmem %s119, 7 [#allocation0]
    %v121 = vld [vmem:[%s120] ss:$-1 sm:$0xff]
    %v122 = vrot.slane %v121, 1
    %123 = vst [vmem:[%s118] sm:$0xff] %v122
    %s124 = scalar_lea.vmem %s119, 8 [#allocation0]
    %s125 = scalar_lea.vmem %s124, 7 [#allocation0]
    %v126 = vld [vmem:[%s125] ss:$-1 sm:$0xff]
    %v127 = vrot.slane %v126, 1
    %v128 = vlaneseq
    %v129 = vshrl.u32 %v128, 7
    %vm130 = vcmp.lt.s32.totalorder %v129, 7
    %131 = vst.msk [vmem:[%s118] sm:$0xff] %vm130, %v127
    %s132 = scalar_lea.vmem [#allocation1], 40
    %s133 = scalar_lea.vmem [#allocation0], 80
    %s134 = scalar_lea.vmem %s133, 7 [#allocation0]
    %v135 = vld [vmem:[%s134] ss:$-1 sm:$0xff]
    %v136 = vrot.slane %v135, 1
    %137 = vst [vmem:[%s132] sm:$0xff] %v136
    %s138 = scalar_lea.vmem %s133, 8 [#allocation0]
    %s139 = scalar_lea.vmem %s138, 7 [#allocation0]
    %v140 = vld [vmem:[%s139] ss:$-1 sm:$0xff]
    %v141 = vrot.slane %v140, 1
    %v142 = vlaneseq
    %v143 = vshrl.u32 %v142, 7
    %vm144 = vcmp.lt.s32.totalorder %v143, 7
    %145 = vst.msk [vmem:[%s132] sm:$0xff] %vm144, %v141
    %s146 = scalar_lea.vmem [#allocation1], 48
    %s147 = scalar_lea.vmem [#allocation0], 96
    %s148 = scalar_lea.vmem %s147, 7 [#allocation0]
    %v149 = vld [vmem:[%s148] ss:$-1 sm:$0xff]
    %v150 = vrot.slane %v149, 1
    %151 = vst [vmem:[%s146] sm:$0xff] %v150
    %s152 = scalar_lea.vmem %s147, 8 [#allocation0]
    %s153 = scalar_lea.vmem %s152, 7 [#allocation0]
    %v154 = vld [vmem:[%s153] ss:$-1 sm:$0xff]
    %v155 = vrot.slane %v154, 1
    %v156 = vlaneseq
    %v157 = vshrl.u32 %v156, 7
    %vm158 = vcmp.lt.s32.totalorder %v157, 7
    %159 = vst.msk [vmem:[%s146] sm:$0xff] %vm158, %v155
    %s160 = scalar_lea.vmem [#allocation1], 56
    %s161 = scalar_lea.vmem [#allocation0], 112
    %s162 = scalar_lea.vmem %s161, 7 [#allocation0]
    %v163 = vld [vmem:[%s162] ss:$-1 sm:$0xff]
    %v164 = vrot.slane %v163, 1
    %165 = vst [vmem:[%s160] sm:$0xff] %v164
    %s166 = scalar_lea.vmem %s161, 8 [#allocation0]
    %s167 = scalar_lea.vmem %s166, 7 [#allocation0]
    %v168 = vld [vmem:[%s167] ss:$-1 sm:$0xff]
    %v169 = vrot.slane %v168, 1
    %v170 = vlaneseq
    %v171 = vshrl.u32 %v170, 7
    %vm172 = vcmp.lt.s32.totalorder %v171, 7
    %173 = vst.msk [vmem:[%s160] sm:$0xff] %vm172, %v169
    // Predicated region
    $region36: #{reverse.1} parent=1 // pred_check
      _
    $region37: #{reverse.1} parent=1 // pred_check_branch
      %175 = sbr.rel (0) target = $region39
    $region38: #{reverse.1} parent=1 // pred_region
      // Predicated region
      $region40: #{reverse.1} parent=38 // pred_check
        _
      $region41: #{reverse.1} parent=38 // pred_check_branch
        %177 = sbr.rel (0) target = $region43
      $region42: #{reverse.1} parent=38 // pred_region
        // Predicated region
        $region55: #{reverse.1} parent=42 // pred_check
          _
        $region56: #{reverse.1} parent=42 // pred_check_branch
          %207 = sbr.rel (0) target = $region58
        $region57: #{reverse.1} parent=42 // pred_region
          loop: start=0, step=1, limit=1
          $region59: #{reverse.1} parent=57 // loop_pre_header
            _
          $region60: #{reverse.1} parent=57 // loop_header
            %s209 = sphi 0, %s213
            %p210 = scmp.ge.s32.totalorder %s209, 1
            %s214 = sphi [#allocation1], [#allocation1]
            %s215 = sphi %s1, %s1
          $region61: #{reverse.1} parent=57 // loop_header_branch
            %212 = sbr.rel (%p210) target = $region65
          $region62: #{reverse.1} parent=57 // loop_body
            %v216 = vld [vmem:[%s214] sm:$0xff]
            %217 = vst [vmem:[%s215] sm:$0xff] %v216
            %v218 = vld [vmem:[%s214 + $0x8] sm:$0xff]
            %219 = vst [vmem:[%s215 + $0x8] sm:$0xff] %v218
            %v220 = vld [vmem:[%s214 + $0x10] sm:$0xff]
            %221 = vst [vmem:[%s215 + $0x10] sm:$0xff] %v220
            %v222 = vld [vmem:[%s214 + $0x18] sm:$0xff]
            %223 = vst [vmem:[%s215 + $0x18] sm:$0xff] %v222
            %v224 = vld [vmem:[%s214 + $0x20] sm:$0xff]
            %225 = vst [vmem:[%s215 + $0x20] sm:$0xff] %v224
            %v226 = vld [vmem:[%s214 + $0x28] sm:$0xff]
            %227 = vst [vmem:[%s215 + $0x28] sm:$0xff] %v226
            %v228 = vld [vmem:[%s214 + $0x30] sm:$0xff]
            %229 = vst [vmem:[%s215 + $0x30] sm:$0xff] %v228
            %v230 = vld [vmem:[%s214 + $0x38] sm:$0xff]
            %231 = vst [vmem:[%s215 + $0x38] sm:$0xff] %v230
          $region63: #{reverse.1} parent=57 // loop_footer
            %s213 = sadd.s32 1, %s209
          $region64: #{reverse.1} parent=57 // loop_footer_branch
            %208 = sbr.rel target = $region60
          $region65: #{reverse.1} parent=57 // loop_exit
            _
        $region58: #{reverse.1} parent=42 // pred_fallthru
          _
        // Predicated region
        $region66: #{reverse.1} parent=42 // pred_check
          _
        $region67: #{reverse.1} parent=42 // pred_check_branch
          %233 = sbr.rel target = $region69
        $region68: #{reverse.1} parent=42 // pred_region
          _
        $region69: #{reverse.1} parent=42 // pred_fallthru
          _
      $region43: #{reverse.1} parent=38 // pred_fallthru
        _
      // Predicated region
      $region44: #{reverse.1} parent=38 // pred_check
        _
      $region45: #{reverse.1} parent=38 // pred_check_branch
        %179 = sbr.rel target = $region47
      $region46: #{reverse.1} parent=38 // pred_region
        %s181 = ssub.s32 256, 1
        loop: start=0, step=1, limit=1
        $region48: #{reverse.1} parent=46 // loop_pre_header
          _
        $region49: #{reverse.1} parent=46 // loop_header
          %s183 = sphi 0, %s187
          %p184 = scmp.ge.s32.totalorder %s183, 1
          %s188 = sphi [#allocation1], [#allocation1]
          %s189 = sphi %s1, %s1
        $region50: #{reverse.1} parent=46 // loop_header_branch
          %186 = sbr.rel (%p184) target = $region54
        $region51: #{reverse.1} parent=46 // loop_body
          %v190 = vld [vmem:[%s188] sm:%s181]
          %191 = vst [vmem:[%s189] sm:%s181] %v190
          %v192 = vld [vmem:[%s188 + $0x8] sm:%s181]
          %193 = vst [vmem:[%s189 + $0x8] sm:%s181] %v192
          %v194 = vld [vmem:[%s188 + $0x10] sm:%s181]
          %195 = vst [vmem:[%s189 + $0x10] sm:%s181] %v194
          %v196 = vld [vmem:[%s188 + $0x18] sm:%s181]
          %197 = vst [vmem:[%s189 + $0x18] sm:%s181] %v196
          %v198 = vld [vmem:[%s188 + $0x20] sm:%s181]
          %199 = vst [vmem:[%s189 + $0x20] sm:%s181] %v198
          %v200 = vld [vmem:[%s188 + $0x28] sm:%s181]
          %201 = vst [vmem:[%s189 + $0x28] sm:%s181] %v200
          %v202 = vld [vmem:[%s188 + $0x30] sm:%s181]
          %203 = vst [vmem:[%s189 + $0x30] sm:%s181] %v202
          %v204 = vld [vmem:[%s188 + $0x38] sm:%s181]
          %205 = vst [vmem:[%s189 + $0x38] sm:%s181] %v204
        $region52: #{reverse.1} parent=46 // loop_footer
          %s187 = sadd.s32 1, %s183
        $region53: #{reverse.1} parent=46 // loop_footer_branch
          %182 = sbr.rel target = $region49
        $region54: #{reverse.1} parent=46 // loop_exit
          _
      $region47: #{reverse.1} parent=38 // pred_fallthru
        _
    $region39: #{reverse.1} parent=1 // pred_fallthru
      _
    %234 = vnop

// kernel: spectral_convolution.1
$region0: #{spectral_convolution.1}
  #allocation0 [shape = 'u32[]', space=smem, size = 0x4, offset = 0x4, fixed_abs, tag = 'smem constant byte address 0x4 - core index']
  #allocation1 [shape = 'u32[72,128]{1,0:T(1,128)}', space=vmem, size = 0x9000, scoped, tag = 'internal scratch']
  %s0 = inlined_call_operand.vmem [shape: f32[2,16,2,8], index: 0, kind: input, shape index: {}]
  %s1 = inlined_call_operand.vmem [shape: f32[2,16,8,128], index: 1, kind: input, shape index: {}]
  %s2 = inlined_call_operand.vmem [shape: f32[2,16,2,128], index: 2, kind: output, shape index: {}]
  %s3 = sld [smem:[#allocation0]]
  $region41: #{spectral_convolution.1} parent=0
    _
  %s5 = ssub.s32 1, %s3
  %s6 = scalar_select 0, %s5, %s3
  loop: start=0, step=1, limit=6
  $region2: #{spectral_convolution.1} parent=0 // loop_pre_header
    _
  $region3: #{spectral_convolution.1} parent=0 // loop_header
    %s8 = sphi 0, %s12
    %p9 = scmp.ge.s32.totalorder %s8, 6
    %s15 = sphi 0, %s27
    %s16 = sphi 0, %s23
    %s17 = sphi 0, %s15
    %s18 = sphi 0, %s16
    %s19 = sphi 0, %s17
    %s20 = sphi 0, %s18
    %s32 = sphi 0, %s34
    %s35 = sphi 0, %s32
    %s36 = sphi 0, %s35
    %s52 = sphi 0, %s36
    %s60 = sphi 0, %s62
    %s63 = sphi 0, %s60
    %s64 = sphi 0, %s63
    %s80 = sphi 0, %s64
    %s88 = sphi 0, %s90
    %s91 = sphi 0, %s88
    %s92 = sphi 0, %s91
    %s108 = sphi 0, %s92
  $region4: #{spectral_convolution.1} parent=0 // loop_header_branch
    %11 = sbr.rel (%p9) target = $region8
  $region5: #{spectral_convolution.1} parent=0 // loop_body
    %s13 = ssub.s32 %s8, 1
    %s14 = ssub.s32 %s8, 2
    %s21 = sadd.s32 1, %s16
    %p22 = scmp.ge.s32.totalorder %s21, 2
    %s23 = scalar_select %p22, 0, %s21
    %s24 = sadd.s32 1, %s15
    %s25 = scalar_select %p22, %s24, %s15
    %p26 = scmp.ge.s32.totalorder %s25, 2
    %s27 = scalar_select %p26, 0, %s25
    %s28 = ssub.s32 %s15, %s27
    %s29 = ssub.s32 %s16, %s23
    %s30 = sor.u32 %s28, %s29
    %p31 = scmp.eq.s32.totalorder %s30, 0
    %s33 = sadd.s32 %s32, 1
    %s34 = scalar_select %p31, %s32, %s33
    %p37 = pneg %p31
    %p38 = scmp.eq.s32.totalorder %s8, 3
    %p39 = por %p37, %p38
    %p40 = scmp.ne.s32.totalorder %s32, %s35
    %p41 = scmp.eq.s32.totalorder %s8, 0
    %p42 = por %p40, %p41
    %p43 = scmp.ne.s32.totalorder %s32, %s35
    %p44 = scmp.eq.s32.totalorder %s13, 3
    %p45 = por %p43, %p44
    %p46 = scmp.ne.s32.totalorder %s35, %s36
    %p47 = scmp.eq.s32.totalorder %s13, 0
    %p48 = por %p46, %p47
    %p49 = scmp.ne.s32.totalorder %s35, %s36
    %p50 = scmp.eq.s32.totalorder %s14, 3
    %p51 = por %p49, %p50
    %p53 = scmp.ne.s32.totalorder %s36, %s52
    %p54 = scmp.eq.s32.totalorder %s14, 0
    %p55 = por %p53, %p54
    %s56 = ssub.s32 %s15, %s27
    %s57 = ssub.s32 %s16, %s23
    %s58 = sor.u32 %s56, %s57
    %p59 = scmp.eq.s32.totalorder %s58, 0
    %s61 = sadd.s32 %s60, 1
    %s62 = scalar_select %p59, %s60, %s61
    %p65 = pneg %p59
    %p66 = scmp.eq.s32.totalorder %s8, 3
    %p67 = por %p65, %p66
    %p68 = scmp.ne.s32.totalorder %s60, %s63
    %p69 = scmp.eq.s32.totalorder %s8, 0
    %p70 = por %p68, %p69
    %p71 = scmp.ne.s32.totalorder %s60, %s63
    %p72 = scmp.eq.s32.totalorder %s13, 3
    %p73 = por %p71, %p72
    %p74 = scmp.ne.s32.totalorder %s63, %s64
    %p75 = scmp.eq.s32.totalorder %s13, 0
    %p76 = por %p74, %p75
    %p77 = scmp.ne.s32.totalorder %s63, %s64
    %p78 = scmp.eq.s32.totalorder %s14, 3
    %p79 = por %p77, %p78
    %p81 = scmp.ne.s32.totalorder %s64, %s80
    %p82 = scmp.eq.s32.totalorder %s14, 0
    %p83 = por %p81, %p82
    %s84 = ssub.s32 %s15, %s27
    %s85 = ssub.s32 %s16, %s23
    %s86 = sor.u32 %s84, %s85
    %p87 = scmp.eq.s32.totalorder %s86, 0
    %s89 = sadd.s32 %s88, 1
    %s90 = scalar_select %p87, %s88, %s89
    %p93 = pneg %p87
    %p94 = scmp.eq.s32.totalorder %s8, 3
    %p95 = por %p93, %p94
    %p96 = scmp.ne.s32.totalorder %s88, %s91
    %p97 = scmp.eq.s32.totalorder %s8, 0
    %p98 = por %p96, %p97
    %p99 = scmp.ne.s32.totalorder %s88, %s91
    %p100 = scmp.eq.s32.totalorder %s13, 3
    %p101 = por %p99, %p100
    %p102 = scmp.ne.s32.totalorder %s91, %s92
    %p103 = scmp.eq.s32.totalorder %s13, 0
    %p104 = por %p102, %p103
    %p105 = scmp.ne.s32.totalorder %s91, %s92
    %p106 = scmp.eq.s32.totalorder %s14, 3
    %p107 = por %p105, %p106
    %p109 = scmp.ne.s32.totalorder %s92, %s108
    %p110 = scmp.eq.s32.totalorder %s14, 0
    %p111 = por %p109, %p110
    %p112 = scmp.le.s32.totalorder 1, %s8
    %p113 = scmp.lt.s32.totalorder %s8, 5
    %p114 = pnand %p112, %p113
    %p115 = pneg %p114
    // Predicated region
    $region9: #{spectral_convolution.1} parent=5 // pred_check
      _
    $region10: #{spectral_convolution.1} parent=5 // pred_check_branch
      %117 = sbr.rel (%p114) target = $region12
    $region11: #{spectral_convolution.1} parent=5 // pred_region
      %s118 = ssub.s32 %s8, 1
    $region12: #{spectral_convolution.1} parent=5 // pred_fallthru
      _
    %p119 = scmp.lt.s32.totalorder %s8, 4
    // Predicated region
    $region13: #{spectral_convolution.1} parent=5 // pred_check
      %p120 = pneg %p119
    $region14: #{spectral_convolution.1} parent=5 // pred_check_branch
      %122 = sbr.rel (%p120) target = $region16
    $region15: #{spectral_convolution.1} parent=5 // pred_region
      // Predicated region
      $region17: #{spectral_convolution.1} parent=15 // pred_check
        %p123 = pneg %p42
      $region18: #{spectral_convolution.1} parent=15 // pred_check_branch
        %125 = sbr.rel (%p123) target = $region20
      $region19: #{spectral_convolution.1} parent=15 // pred_region
        %s126 = smul.u32 8, %s16
        %p127 = scmp.lt.s32.totalorder %s15, 1
        %s128 = scalar_select %p127, %s15, 1
        %p129 = scmp.lt.s32.totalorder %s126, 15
        %s130 = scalar_select %p129, %s126, 15
        %s131 = smul.addr %s128, 16
        %s132 = sadd.s32 %s130, %s131
        %s133 = smul.addr %s132, 2
        %s134 = scalar_lea.vmem %s0, %s133
        %s135 = smul.u32 8, %s16
      $region20: #{spectral_convolution.1} parent=15 // pred_fallthru
        _
      // Predicated region
      $region21: #{spectral_convolution.1} parent=15 // pred_check
        %p136 = pneg %p70
      $region22: #{spectral_convolution.1} parent=15 // pred_check_branch
        %138 = sbr.rel (%p136) target = $region24
      $region23: #{spectral_convolution.1} parent=15 // pred_region
        %s139 = smul.u32 8, %s16
        %p140 = scmp.lt.s32.totalorder %s15, 1
        %s141 = scalar_select %p140, %s15, 1
        %p142 = scmp.lt.s32.totalorder %s139, 15
        %s143 = scalar_select %p142, %s139, 15
        %s144 = smul.addr %s141, 16
        %s145 = sadd.s32 %s143, %s144
        %s146 = smul.addr %s145, 8
        %s147 = scalar_lea.vmem %s1, %s146
        %s148 = smul.u32 8, %s16
      $region24: #{spectral_convolution.1} parent=15 // pred_fallthru
        _
    $region16: #{spectral_convolution.1} parent=5 // pred_fallthru
      _
    %p149 = scmp.le.s32.totalorder 1, %s8
    %p150 = scmp.lt.s32.totalorder %s8, 5
    %p151 = pnand %p149, %p150
    %p152 = pneg %p151
    // Predicated region
    $region25: #{spectral_convolution.1} parent=5 // pred_check
      _
    $region26: #{spectral_convolution.1} parent=5 // pred_check_branch
      %154 = sbr.rel (%p151) target = $region28
    $region27: #{spectral_convolution.1} parent=5 // pred_region
      %s155 = ssub.s32 %s8, 1
      %s156 = smul.u32 8, %s18
      %p157 = scmp.lt.s32.totalorder %s17, 1
      %s158 = scalar_select %p157, %s17, 1
      %p159 = scmp.lt.s32.totalorder %s156, 15
      %s160 = scalar_select %p159, %s156, 15
      %s161 = smul.addr %s158, 16
      %s162 = sadd.s32 %s160, %s161
      %s163 = smul.addr %s162, 2
      %s164 = scalar_lea.vmem %s0, %s163
      %p165 = pneg %p48
      %p166 = pneg %p45
      %s167 = smul.u32 8, %s18
      %p168 = scmp.lt.s32.totalorder %s17, 1
      %s169 = scalar_select %p168, %s17, 1
      %p170 = scmp.lt.s32.totalorder %s167, 15
      %s171 = scalar_select %p170, %s167, 15
      %s172 = smul.addr %s169, 16
      %s173 = sadd.s32 %s171, %s172
      %s174 = smul.addr %s173, 8
      %s175 = scalar_lea.vmem %s1, %s174
      %p176 = pneg %p76
      %p177 = pneg %p73
      %p178 = pneg %p104
      %p179 = pneg %p101
      %s180 = smul.u32 8, %s18
      %p181 = scmp.lt.s32.totalorder %s17, 1
      %s182 = scalar_select %p181, %s17, 1
      %p183 = scmp.lt.s32.totalorder %s180, 15
      %s184 = scalar_select %p183, %s180, 15
      %s185 = smul.addr %s182, 16
      %s186 = sadd.s32 %s184, %s185
      %s187 = smul.addr %s186, 2
      %s188 = scalar_lea.vmem %s2, %s187
      %s189 = smul.u32 8, %s18
      %p190 = scmp.lt.s32.totalorder %s17, 1
      %s191 = scalar_select %p190, %s17, 1
      %p192 = scmp.lt.s32.totalorder %s189, 15
      %s193 = scalar_select %p192, %s189, 15
      %s194 = smul.addr %s191, 16
      %s195 = sadd.s32 %s193, %s194
      %s196 = smul.addr %s195, 2
      %s197 = scalar_lea.vmem %s0, %s196
      %s198 = smul.u32 8, %s18
      %s199 = smul.u32 8, %s18
      %p200 = scmp.lt.s32.totalorder %s17, 1
      %s201 = scalar_select %p200, %s17, 1
      %p202 = scmp.lt.s32.totalorder %s199, 15
      %s203 = scalar_select %p202, %s199, 15
      %s204 = smul.addr %s201, 16
      %s205 = sadd.s32 %s203, %s204
      %s206 = smul.addr %s205, 8
      %s207 = scalar_lea.vmem %s1, %s206
      %s208 = smul.u32 8, %s18
      %s209 = smul.u32 8, %s18
      %p210 = scmp.lt.s32.totalorder %s17, 1
      %s211 = scalar_select %p210, %s17, 1
      %p212 = scmp.lt.s32.totalorder %s209, 15
      %s213 = scalar_select %p212, %s209, 15
      %s214 = smul.addr %s211, 16
      %s215 = sadd.s32 %s213, %s214
      %s216 = smul.addr %s215, 2
      %s217 = scalar_lea.vmem %s2, %s216
      %s218 = smul.u32 8, %s18
      %v219 = vld [vmem:[%s197] sm:$0x3]
      %v220 = vld [vmem:[%s197 + $0x2] sm:$0x3]
      %v221 = vld [vmem:[%s197 + $0x4] sm:$0x3]
      %v222 = vld [vmem:[%s197 + $0x6] sm:$0x3]
      %v223 = vld [vmem:[%s197 + $0x8] sm:$0x3]
      %v224 = vld [vmem:[%s197 + $0xa] sm:$0x3]
      %v225 = vld [vmem:[%s197 + $0xc] sm:$0x3]
      %v226 = vld [vmem:[%s197 + $0xe] sm:$0x3]
      %v227 = vld [vmem:[%s207] sm:$0xff]
      %v228 = vld [vmem:[%s207 + $0x8] sm:$0xff]
      %v229 = vld [vmem:[%s207 + $0x10] sm:$0xff]
      %v230 = vld [vmem:[%s207 + $0x18] sm:$0xff]
      %v231 = vld [vmem:[%s207 + $0x20] sm:$0xff]
      %v232 = vld [vmem:[%s207 + $0x28] sm:$0xff]
      %v233 = vld [vmem:[%s207 + $0x30] sm:$0xff]
      %v234 = vld [vmem:[%s207 + $0x38] sm:$0xff]
      %vm235 = vcmask 64512
      %v237 = vsel %vm235, %v219, 0
      %239 = vmatpush.msra.mxu0 0.0
      %240 = vmatpush.msra.mxu0 0.0
      %241 = vmatpush.msra.mxu0 0.0
      %242 = vmatpush.msra.mxu0 0.0
      %243 = vmatpush.msra.mxu0 0.0
      %244 = vmatpush.msra.mxu0 0.0
      %245 = vmatpush.msra.mxu0 0.0
      %246 = vmatpush.msra.mxu0 0.0
      %247 = vmatpush.msra.mxu0 0.0
      %248 = vmatpush.msra.mxu0 0.0
      %249 = vmatpush.msra.mxu0 0.0
      %250 = vmatpush.msra.mxu0 0.0
      %251 = vmatpush.msra.mxu0 0.0
      %252 = vmatpush.msra.mxu0 0.0
      %253 = vmatpush.msra.mxu0 0.0
      %254 = vmatpush.msra.mxu0 %v227
      %255 = vmatmul.f32.gmra.mxu0 %v237
      %v256 = vpop.f32.mrf.mxu0
      %v257 = vadd.f32 0.0, %v256
      %258 = vdwg.mxu0
      %v260 = vsel %vm235, %v220, 0
      %262 = vmatpush.msra.mxu0 0.0
      %263 = vmatpush.msra.mxu0 0.0
      %264 = vmatpush.msra.mxu0 0.0
      %265 = vmatpush.msra.mxu0 0.0
      %266 = vmatpush.msra.mxu0 0.0
      %267 = vmatpush.msra.mxu0 0.0
      %268 = vmatpush.msra.mxu0 0.0
      %269 = vmatpush.msra.mxu0 0.0
      %270 = vmatpush.msra.mxu0 0.0
      %271 = vmatpush.msra.mxu0 0.0
      %272 = vmatpush.msra.mxu0 0.0
      %273 = vmatpush.msra.mxu0 0.0
      %274 = vmatpush.msra.mxu0 0.0
      %275 = vmatpush.msra.mxu0 0.0
      %276 = vmatpush.msra.mxu0 0.0
      %277 = vmatpush.msra.mxu0 %v228
      %278 = vmatmul.f32.gmra.mxu0 %v260
      %v279 = vpop.f32.mrf.mxu0
      %v280 = vadd.f32 0.0, %v279
      %281 = vdwg.mxu0
      %v283 = vsel %vm235, %v221, 0
      %285 = vmatpush.msra.mxu0 0.0
      %286 = vmatpush.msra.mxu0 0.0
      %287 = vmatpush.msra.mxu0 0.0
      %288 = vmatpush.msra.mxu0 0.0
      %289 = vmatpush.msra.mxu0 0.0
      %290 = vmatpush.msra.mxu0 0.0
      %291 = vmatpush.msra.mxu0 0.0
      %292 = vmatpush.msra.mxu0 0.0
      %293 = vmatpush.msra.mxu0 0.0
      %294 = vmatpush.msra.mxu0 0.0
      %295 = vmatpush.msra.mxu0 0.0
      %296 = vmatpush.msra.mxu0 0.0
      %297 = vmatpush.msra.mxu0 0.0
      %298 = vmatpush.msra.mxu0 0.0
      %299 = vmatpush.msra.mxu0 0.0
      %300 = vmatpush.msra.mxu0 %v229
      %301 = vmatmul.f32.gmra.mxu0 %v283
      %v302 = vpop.f32.mrf.mxu0
      %v303 = vadd.f32 0.0, %v302
      %304 = vdwg.mxu0
      %v306 = vsel %vm235, %v222, 0
      %308 = vmatpush.msra.mxu0 0.0
      %309 = vmatpush.msra.mxu0 0.0
      %310 = vmatpush.msra.mxu0 0.0
      %311 = vmatpush.msra.mxu0 0.0
      %312 = vmatpush.msra.mxu0 0.0
      %313 = vmatpush.msra.mxu0 0.0
      %314 = vmatpush.msra.mxu0 0.0
      %315 = vmatpush.msra.mxu0 0.0
      %316 = vmatpush.msra.mxu0 0.0
      %317 = vmatpush.msra.mxu0 0.0
      %318 = vmatpush.msra.mxu0 0.0
      %319 = vmatpush.msra.mxu0 0.0
      %320 = vmatpush.msra.mxu0 0.0
      %321 = vmatpush.msra.mxu0 0.0
      %322 = vmatpush.msra.mxu0 0.0
      %323 = vmatpush.msra.mxu0 %v230
      %324 = vmatmul.f32.gmra.mxu0 %v306
      %v325 = vpop.f32.mrf.mxu0
      %v326 = vadd.f32 0.0, %v325
      %327 = vdwg.mxu0
      %v329 = vsel %vm235, %v223, 0
      %331 = vmatpush.msra.mxu0 0.0
      %332 = vmatpush.msra.mxu0 0.0
      %333 = vmatpush.msra.mxu0 0.0
      %334 = vmatpush.msra.mxu0 0.0
      %335 = vmatpush.msra.mxu0 0.0
      %336 = vmatpush.msra.mxu0 0.0
      %337 = vmatpush.msra.mxu0 0.0
      %338 = vmatpush.msra.mxu0 0.0
      %339 = vmatpush.msra.mxu0 0.0
      %340 = vmatpush.msra.mxu0 0.0
      %341 = vmatpush.msra.mxu0 0.0
      %342 = vmatpush.msra.mxu0 0.0
      %343 = vmatpush.msra.mxu0 0.0
      %344 = vmatpush.msra.mxu0 0.0
      %345 = vmatpush.msra.mxu0 0.0
      %346 = vmatpush.msra.mxu0 %v231
      %347 = vmatmul.f32.gmra.mxu0 %v329
      %v348 = vpop.f32.mrf.mxu0
      %v349 = vadd.f32 0.0, %v348
      %350 = vdwg.mxu0
      %v352 = vsel %vm235, %v224, 0
      %354 = vmatpush.msra.mxu0 0.0
      %355 = vmatpush.msra.mxu0 0.0
      %356 = vmatpush.msra.mxu0 0.0
      %357 = vmatpush.msra.mxu0 0.0
      %358 = vmatpush.msra.mxu0 0.0
      %359 = vmatpush.msra.mxu0 0.0
      %360 = vmatpush.msra.mxu0 0.0
      %361 = vmatpush.msra.mxu0 0.0
      %362 = vmatpush.msra.mxu0 0.0
      %363 = vmatpush.msra.mxu0 0.0
      %364 = vmatpush.msra.mxu0 0.0
      %365 = vmatpush.msra.mxu0 0.0
      %366 = vmatpush.msra.mxu0 0.0
      %367 = vmatpush.msra.mxu0 0.0
      %368 = vmatpush.msra.mxu0 0.0
      %369 = vmatpush.msra.mxu0 %v232
      %370 = vmatmul.f32.gmra.mxu0 %v352
      %v371 = vpop.f32.mrf.mxu0
      %v372 = vadd.f32 0.0, %v371
      %373 = vdwg.mxu0
      %v375 = vsel %vm235, %v225, 0
      %377 = vmatpush.msra.mxu0 0.0
      %378 = vmatpush.msra.mxu0 0.0
      %379 = vmatpush.msra.mxu0 0.0
      %380 = vmatpush.msra.mxu0 0.0
      %381 = vmatpush.msra.mxu0 0.0
      %382 = vmatpush.msra.mxu0 0.0
      %383 = vmatpush.msra.mxu0 0.0
      %384 = vmatpush.msra.mxu0 0.0
      %385 = vmatpush.msra.mxu0 0.0
      %386 = vmatpush.msra.mxu0 0.0
      %387 = vmatpush.msra.mxu0 0.0
      %388 = vmatpush.msra.mxu0 0.0
      %389 = vmatpush.msra.mxu0 0.0
      %390 = vmatpush.msra.mxu0 0.0
      %391 = vmatpush.msra.mxu0 0.0
      %392 = vmatpush.msra.mxu0 %v233
      %393 = vmatmul.f32.gmra.mxu0 %v375
      %v394 = vpop.f32.mrf.mxu0
      %v395 = vadd.f32 0.0, %v394
      %396 = vdwg.mxu0
      %v398 = vsel %vm235, %v226, 0
      %400 = vmatpush.msra.mxu0 0.0
      %401 = vmatpush.msra.mxu0 0.0
      %402 = vmatpush.msra.mxu0 0.0
      %403 = vmatpush.msra.mxu0 0.0
      %404 = vmatpush.msra.mxu0 0.0
      %405 = vmatpush.msra.mxu0 0.0
      %406 = vmatpush.msra.mxu0 0.0
      %407 = vmatpush.msra.mxu0 0.0
      %408 = vmatpush.msra.mxu0 0.0
      %409 = vmatpush.msra.mxu0 0.0
      %410 = vmatpush.msra.mxu0 0.0
      %411 = vmatpush.msra.mxu0 0.0
      %412 = vmatpush.msra.mxu0 0.0
      %413 = vmatpush.msra.mxu0 0.0
      %414 = vmatpush.msra.mxu0 0.0
      %415 = vmatpush.msra.mxu0 %v234
      %416 = vmatmul.f32.gmra.mxu0 %v398
      %v417 = vpop.f32.mrf.mxu0
      %v418 = vadd.f32 0.0, %v417
      %419 = vdwg.mxu0
      %420 = vst [vmem:[%s217] sm:$0x3] %v257
      %421 = vst [vmem:[%s217 + $0x2] sm:$0x3] %v280
      %422 = vst [vmem:[%s217 + $0x4] sm:$0x3] %v303
      %423 = vst [vmem:[%s217 + $0x6] sm:$0x3] %v326
      %424 = vst [vmem:[%s217 + $0x8] sm:$0x3] %v349
      %425 = vst [vmem:[%s217 + $0xa] sm:$0x3] %v372
      %426 = vst [vmem:[%s217 + $0xc] sm:$0x3] %v395
      %427 = vst [vmem:[%s217 + $0xe] sm:$0x3] %v418
      %s428 = smul.u32 8, %s18
      %p429 = scmp.lt.s32.totalorder %s17, 1
      %s430 = scalar_select %p429, %s17, 1
      %p431 = scmp.lt.s32.totalorder %s428, 15
      %s432 = scalar_select %p431, %s428, 15
      %s433 = smul.addr %s430, 16
      %s434 = sadd.s32 %s432, %s433
      %s435 = smul.addr %s434, 2
      %s436 = scalar_lea.vmem %s2, %s435
      // Predicated region
      $region29: #{spectral_convolution.1} parent=27 // pred_check
        %p437 = pneg %p101
      $region30: #{spectral_convolution.1} parent=27 // pred_check_branch
        %439 = sbr.rel (%p437) target = $region32
      $region31: #{spectral_convolution.1} parent=27 // pred_region
        %s440 = smul.u32 8, %s18
      $region32: #{spectral_convolution.1} parent=27 // pred_fallthru
        _
    $region28: #{spectral_convolution.1} parent=5 // pred_fallthru
      _
    %p441 = scmp.le.s32.totalorder 2, %s8
    // Predicated region
    $region33: #{spectral_convolution.1} parent=5 // pred_check
      %p442 = pneg %p441
    $region34: #{spectral_convolution.1} parent=5 // pred_check_branch
      %444 = sbr.rel (%p442) target = $region36
    $region35: #{spectral_convolution.1} parent=5 // pred_region
      %s445 = ssub.s32 %s8, 2
      // Predicated region
      $region37: #{spectral_convolution.1} parent=35 // pred_check
        %p446 = pneg %p107
      $region38: #{spectral_convolution.1} parent=35 // pred_check_branch
        %448 = sbr.rel (%p446) target = $region40
      $region39: #{spectral_convolution.1} parent=35 // pred_region
        %s449 = smul.u32 8, %s20
        %p450 = scmp.lt.s32.totalorder %s19, 1
        %s451 = scalar_select %p450, %s19, 1
        %p452 = scmp.lt.s32.totalorder %s449, 15
        %s453 = scalar_select %p452, %s449, 15
        %s454 = smul.addr %s451, 16
        %s455 = sadd.s32 %s453, %s454
        %s456 = smul.addr %s455, 2
        %s457 = scalar_lea.vmem %s2, %s456
      $region40: #{spectral_convolution.1} parent=35 // pred_fallthru
        _
    $region36: #{spectral_convolution.1} parent=5 // pred_fallthru
      _
  $region6: #{spectral_convolution.1} parent=0 // loop_footer
    %s12 = sadd.s32 1, %s8
  $region7: #{spectral_convolution.1} parent=0 // loop_footer_branch
    %7 = sbr.rel target = $region3
  $region8: #{spectral_convolution.1} parent=0 // loop_exit
    _

</llo_original>
